<compile_context>
chip_gen: v7x
topology: tpu7x:2x2x1
jax: 0.10.0
libtpu: 0.0.40
codegen_flags: <defaults>
</compile_context>

<pallas_src>
import jax
import jax.numpy as jnp
from jax.experimental import pallas as pl
from jax.experimental.pallas import tpu as pltpu

VERY_BIG_NUMBER = 1e30
VERY_NEGATIVE_NUMBER = -VERY_BIG_NUMBER

LANE = 128


def _round_up(x, m):
    return ((x + m - 1) // m) * m


def _make_tf_linear_kernel(trilinear: bool):
    """Kernel over one (batch row, L-tile) block.

    Refs:
      a_ref, b_ref : (1, tl, H)  activation blocks in native (B, L, H) layout
      add_ref      : (1, 1, tl)  precomputed  bias + (1 - mask) * (-1e30)
      w_ref        : (H, k)      per-term weight columns of the nn.Linear
      o_ref        : (1, 1, tl)  masked logits
    """
    def kernel(a_ref, b_ref, add_ref, w_ref, o_ref):
        # Upcast, then transpose in-kernel so H lands on sublanes and the
        # L-tile on lanes: the H-contraction becomes a cheap sublane reduce
        # and the final store is lane-dense.  The transpose runs on the XLU
        # (otherwise idle here) and hides under the activation DMA.
        a = a_ref[0].astype(jnp.float32).T        # (H, tl)
        b = b_ref[0].astype(jnp.float32).T        # (H, tl)

        # VPU FMAs; (H, 1) weight columns broadcast across the lane axis.
        prod = a * w_ref[:, 0:1] + b * w_ref[:, 1:2]
        if trilinear:
            prod = prod + (a * b) * w_ref[:, 2:3]

        # Reduce over H (sublane axis) -> (1, tl), lane-dense.
        s = jnp.sum(prod, axis=0, keepdims=True)

        # Add folded bias + exp_mask term and store (lane-dense store).
        o_ref[...] = (s[None] + add_ref[...]).astype(o_ref.dtype)

    return kernel


def _vmem_limit_bytes():
    """Generation-aware scoped-VMEM budget: ~75% of physical, capped at 100 MiB.

    v7x (64 MiB physical) -> ~48 MiB; v5e/v6e (128 MiB physical) -> ~96 MiB.
    """
    try:
        cap = pltpu.get_tpu_info().vmem_capacity_bytes
        return int(min(cap * 3 // 4, 100 * 1024 * 1024))
    except Exception:
        return 48 * 1024 * 1024   # safe on every generation (incl. v7x, 64 MiB)


def _pick_tl(L, H, itemsize, B, tl):
    """Pick the L-tile so a+b activation bytes per grid step are ~2 MiB."""
    if tl is None:
        target_bytes = 2 * 1024 * 1024
        tl = max(LANE, (target_bytes // (2 * H * itemsize)) // LANE * LANE)
        tl = min(tl, 8192)
    else:
        tl = max(LANE, _round_up(tl, LANE))
    if tl >= L:
        # Single-tile regime.  On v7x keep >=2 grid steps when B == 1 so both
        # TensorCores get work (no-op for v5e/v6e, which have a single TC).
        if B == 1 and L >= 2 * LANE:
            return _round_up((L + 1) // 2, LANE)
        return L
    return tl


def tf_linear(a, b, mask, weight, bias, *, func="trilinear", tl=None, interpret=False):
    """TFLinear.forward.

    a, b   : (B, L, H) activations (f32 or bf16), native layout — NOT transposed
    mask   : (B, L) float, 1.0 = keep, 0.0 = masked
    weight : (1, k*H) nn.Linear weight (k = 2 for 'linear', 3 for 'trilinear')
    bias   : (1,) nn.Linear bias
    returns: (B, L) exp-masked logits (f32)
    """
    trilinear = func == "trilinear"
    if not trilinear:
        assert func == "linear", f"unknown func: {func}"
    k = 3 if trilinear else 2

    B, L, H = a.shape
    assert b.shape == (B, L, H) and mask.shape == (B, L)
    assert weight.shape == (1, k * H) and bias.shape == (1,)

    tl = _pick_tl(L, H, jnp.dtype(a.dtype).itemsize, B, tl)
    n_l = pl.cdiv(L, tl)
    Lp = n_l * tl

    # Per-term weight columns packed into one small (H, k) array.
    w_cols = weight.reshape(k, H).T.astype(jnp.float32)        # (H, k)

    # Fold scalar bias and exp_mask into one additive (B, 1, Lp) term.
    addend = bias[0].astype(jnp.float32) + (1.0 - mask.astype(jnp.float32)) * VERY_NEGATIVE_NUMBER
    if Lp != L:
        addend = jnp.pad(addend, ((0, 0), (0, Lp - L)))        # tiny (B, L) array
    addend = addend.reshape(B, 1, Lp)

    grid = (B, n_l)
    act_spec = pl.BlockSpec((1, tl, H), lambda i, j: (i, j, 0))
    row_spec = pl.BlockSpec((1, 1, tl), lambda i, j: (i, 0, j))
    w_spec = pl.BlockSpec((H, k), lambda i, j: (0, 0))

    out = pl.pallas_call(
        _make_tf_linear_kernel(trilinear),
        grid=grid,
        in_specs=[act_spec, act_spec, row_spec, w_spec],
        out_specs=row_spec,
        out_shape=jax.ShapeDtypeStruct((B, 1, Lp), jnp.float32),
        compiler_params=pltpu.CompilerParams(
            # Both grid axes independent -> shard across v7x's 2 TensorCores.
            dimension_semantics=("parallel", "parallel"),
            vmem_limit_bytes=_vmem_limit_bytes(),
        ),
        interpret=interpret,
    )(a, b, addend, w_cols)

    return out[:, 0, :L]


def _reference(a, b, mask, weight, bias, func):
    """Pure-JAX reference (exact f32 VPU math, no dot-precision ambiguity)."""
    B, L, H = a.shape
    a_ = a.astype(jnp.float32).reshape(-1, H)
    b_ = b.astype(jnp.float32).reshape(-1, H)
    if func == "trilinear":
        inp = jnp.concatenate([a_, b_, a_ * b_], axis=1)
    else:
        inp = jnp.concatenate([a_, b_], axis=1)
    out = jnp.sum(inp * weight.reshape(-1), axis=1) + bias[0]
    out = out.reshape(B, L)
    return out + (1.0 - mask) * VERY_NEGATIVE_NUMBER


if __name__ == "__main__":
    master = jax.random.PRNGKey(0)
    keys = jax.random.split(master, 20)

    def run_case(B, L, H, func, dtype, tl, case_keys):
        ka, kb, km, kw, kbb = case_keys
        a = jax.random.normal(ka, (B, L, H), dtype=jnp.float32)
        b = jax.random.normal(kb, (B, L, H), dtype=jnp.float32)
        # mask: 1.0 = keep, 0.0 = masked; keep at least one position per row.
        mask = (jax.random.uniform(km, (B, L)) > 0.3).astype(jnp.float32)
        mask = mask.at[:, 0].set(1.0)

        k = 3 if func == "trilinear" else 2
        bound = 1.0 / ((k * H) ** 0.5)
        weight = jax.random.uniform(kw, (1, k * H), jnp.float32, -bound, bound)
        bias = jax.random.uniform(kbb, (1,), jnp.float32, -bound, bound)

        a_in = a.astype(dtype)
        b_in = b.astype(dtype)
        out = tf_linear(a_in, b_in, mask, weight, bias, func=func, tl=tl)
        out = jax.block_until_ready(out)
        # Reference uses the same (possibly bf16-rounded) activations; kernel
        # math is f32 in both paths, so the comparison stays tight.
        ref = _reference(a_in, b_in, mask, weight, bias, func)

        assert out.shape == (B, L)
        assert jnp.allclose(out, ref, atol=2e-3, rtol=1e-4), (
            f"mismatch: func={func} dtype={dtype} B={B} L={L} H={H}")

    # Small shapes consistent with the module: batch=2, seq=8, hidden=32.
    run_case(2, 8, 32, "trilinear", jnp.float32, None, keys[0:5])
    run_case(2, 8, 32, "linear", jnp.float32, None, keys[5:10])
    # Multi-tile grid path (3 L-tiles per batch row) in f32 ...
    run_case(2, 384, 32, "trilinear", jnp.float32, 128, keys[10:15])
    # ... and with bf16 activations (halved HBM read traffic).
    run_case(2, 384, 32, "trilinear", jnp.bfloat16, 128, keys[15:20])

    print("KERNEL_OK")
</pallas_src>

<mosaic_0001>
module attributes {stable_mosaic.version = 11 : i64} {
  func.func @kernel(%arg0: i32, %arg1: i32, %arg2: memref<1x8x32xf32, #tpu.memory_space<vmem>>, %arg3: memref<1x8x32xf32, #tpu.memory_space<vmem>>, %arg4: memref<1x1x8xf32, #tpu.memory_space<vmem>>, %arg5: memref<32x3xf32, #tpu.memory_space<vmem>>, %arg6: memref<1x1x8xf32, #tpu.memory_space<vmem>>) attributes {dimension_semantics = [#tpu.dimension_semantics<parallel>, #tpu.dimension_semantics<parallel>], iteration_bounds = array<i64: 2, 1>, scalar_prefetch = 0 : i64, scratch_operands = 0 : i64, tpu.core_type = #tpu.core_type<tc>, window_params = [{transform_indices = @transform_0, window_bounds = array<i64: 1, 8, 32>}, {transform_indices = @transform_1, window_bounds = array<i64: 1, 8, 32>}, {transform_indices = @transform_2, window_bounds = array<i64: 1, 1, 8>}, {pipeline_mode = #tpu.pipeline_mode<synchronous>, transform_indices = @transform_3, window_bounds = array<i64: 32, 3>}, {transform_indices = @transform_4, window_bounds = array<i64: 1, 1, 8>}]} {
    %c0 = arith.constant 0 : index
    %c0_0 = arith.constant 0 : index
    %c0_1 = arith.constant 0 : index
    %0 = vector.load %arg2[%c0, %c0_0, %c0_1] : memref<1x8x32xf32, #tpu.memory_space<vmem>>, vector<1x8x32xf32>
    %1 = vector.shape_cast %0 : vector<1x8x32xf32> to vector<8x32xf32>
    %2 = tpu.transpose %1, [1, 0] : vector<8x32xf32> -> vector<32x8xf32>
    %c0_2 = arith.constant 0 : index
    %c0_3 = arith.constant 0 : index
    %c0_4 = arith.constant 0 : index
    %3 = vector.load %arg3[%c0_2, %c0_3, %c0_4] : memref<1x8x32xf32, #tpu.memory_space<vmem>>, vector<1x8x32xf32>
    %4 = vector.shape_cast %3 : vector<1x8x32xf32> to vector<8x32xf32>
    %5 = tpu.transpose %4, [1, 0] : vector<8x32xf32> -> vector<32x8xf32>
    %c0_5 = arith.constant 0 : index
    %c0_6 = arith.constant 0 : index
    %6 = vector.load %arg5[%c0_5, %c0_6] : memref<32x3xf32, #tpu.memory_space<vmem>>, vector<32x1xf32>
    %7 = vector.broadcast %6 : vector<32x1xf32> to vector<32x8xf32>
    %8 = arith.mulf %2, %7 : vector<32x8xf32>
    %c0_7 = arith.constant 0 : index
    %c1 = arith.constant 1 : index
    %9 = vector.load %arg5[%c0_7, %c1] : memref<32x3xf32, #tpu.memory_space<vmem>>, vector<32x1xf32>
    %10 = vector.broadcast %9 : vector<32x1xf32> to vector<32x8xf32>
    %11 = arith.mulf %5, %10 : vector<32x8xf32>
    %12 = arith.addf %8, %11 : vector<32x8xf32>
    %13 = arith.mulf %2, %5 : vector<32x8xf32>
    %c0_8 = arith.constant 0 : index
    %c2 = arith.constant 2 : index
    %14 = vector.load %arg5[%c0_8, %c2] : memref<32x3xf32, #tpu.memory_space<vmem>>, vector<32x1xf32>
    %15 = vector.broadcast %14 : vector<32x1xf32> to vector<32x8xf32>
    %16 = arith.mulf %13, %15 : vector<32x8xf32>
    %17 = arith.addf %12, %16 : vector<32x8xf32>
    %cst = arith.constant dense<0.000000e+00> : vector<8xf32>
    %18 = vector.multi_reduction <add>, %17, %cst [0] : vector<32x8xf32> to vector<8xf32>
    %19 = vector.shape_cast %18 : vector<8xf32> to vector<1x8xf32>
    %20 = vector.shape_cast %19 : vector<1x8xf32> to vector<1x1x8xf32>
    %c0_9 = arith.constant 0 : index
    %c0_10 = arith.constant 0 : index
    %c0_11 = arith.constant 0 : index
    %21 = vector.load %arg4[%c0_9, %c0_10, %c0_11] : memref<1x1x8xf32, #tpu.memory_space<vmem>>, vector<1x1x8xf32>
    %22 = arith.addf %20, %21 : vector<1x1x8xf32>
    %c0_12 = arith.constant 0 : index
    %c0_13 = arith.constant 0 : index
    %c0_14 = arith.constant 0 : index
    %23 = vector.load %arg6[%c0_12, %c0_13, %c0_14] : memref<1x1x8xf32, #tpu.memory_space<vmem>>, vector<1x1x8xf32>
    tpu.vector_store %arg6[%c0_12, %c0_13, %c0_14], %22 {strides = array<i32>} : memref<1x1x8xf32, #tpu.memory_space<vmem>>, vector<1x1x8xf32>,
    return
  }
  func.func @transform_0(%arg0: i32, %arg1: i32) -> (i32, i32, i32) {
    %c0_i32 = arith.constant 0 : i32
    %c0_i32_0 = arith.constant 0 : i32
    return %arg0, %arg1, %c0_i32 : i32, i32, i32
  }
  func.func @transform_1(%arg0: i32, %arg1: i32) -> (i32, i32, i32) {
    %c0_i32 = arith.constant 0 : i32
    %c0_i32_0 = arith.constant 0 : i32
    return %arg0, %arg1, %c0_i32 : i32, i32, i32
  }
  func.func @transform_2(%arg0: i32, %arg1: i32) -> (i32, i32, i32) {
    %c0_i32 = arith.constant 0 : i32
    %c0_i32_0 = arith.constant 0 : i32
    return %arg0, %c0_i32, %arg1 : i32, i32, i32
  }
  func.func @transform_3(%arg0: i32, %arg1: i32) -> (i32, i32) {
    %c0_i32 = arith.constant 0 : i32
    %c0_i32_0 = arith.constant 0 : i32
    %c0_i32_1 = arith.constant 0 : i32
    return %c0_i32, %c0_i32_0 : i32, i32
  }
  func.func @transform_4(%arg0: i32, %arg1: i32) -> (i32, i32, i32) {
    %c0_i32 = arith.constant 0 : i32
    %c0_i32_0 = arith.constant 0 : i32
    return %arg0, %c0_i32, %arg1 : i32, i32, i32
  }
}

</mosaic_0001>

<llo_original>
// kernel: tpu_custom_call.1
$region0: #{tpu_custom_call.1}
  #allocation0 [shape = 'u32[]', space=smem, size = 0x4, offset = 0x4, fixed_abs, tag = 'smem constant byte address 0x4 - core index']
  #allocation1 [shape = 'u32[144,128]{1,0:T(1,128)}', space=vmem, size = 0x12000, scoped, tag = 'internal scratch']
  %s0 = inlined_call_operand.vmem [shape: f32[2,8,32], index: 0, kind: input, shape index: {}]
  %s1 = inlined_call_operand.vmem [shape: f32[2,8,32], index: 1, kind: input, shape index: {}]
  %s2 = inlined_call_operand.vmem [shape: f32[2,1,8], index: 2, kind: input, shape index: {}]
  %s3 = inlined_call_operand.vmem [shape: f32[32,3], index: 3, kind: input, shape index: {}]
  %s4 = inlined_call_operand.hbm [shape: f32[2,1,8], index: 4, kind: output, shape index: {}]
  %s5 = sld [smem:[#allocation0]]
  $region49: #{tpu_custom_call.1} parent=0
    _
  %s7 = ssub.s32 1, %s5
  %s8 = scalar_select 0, %s7, %s5
  $region1: #{tpu_custom_call.1} parent=0
    #allocation2 [shape = 'u8[1024]{0}', space=vmem, size = 0x400, scoped, tag = 'output window, operand 0']
    #allocation3 [shape = 's32[2]{0}', space=sflag, size = 0x8, scoped, tag = 'scoped memory for tpu_custom_call.1']
    %9 = vsyncpa [#allocation3], 0
    %s10 = scalar_lea.sflag [#allocation3], 1
    %11 = vsyncpa %s10, 0
    loop: start=0, step=1, limit=4
    $region2: #{tpu_custom_call.1} parent=1 // loop_pre_header
      _
    $region3: #{tpu_custom_call.1} parent=1 // loop_header
      %s13 = sphi 0, %s17
      %p14 = scmp.ge.s32.totalorder %s13, 4
      %s20 = sphi 0, %s32
      %s21 = sphi 0, %s28
      %s22 = sphi 0, %s20
      %s23 = sphi 0, %s21
      %s24 = sphi 0, %s22
      %s25 = sphi 0, %s23
      %s37 = sphi 0, %s39
      %s40 = sphi 0, %s37
      %s41 = sphi 0, %s40
      %s57 = sphi 0, %s41
      %s65 = sphi 0, %s67
      %s68 = sphi 0, %s65
      %s69 = sphi 0, %s68
      %s85 = sphi 0, %s69
      %s93 = sphi 0, %s95
      %s96 = sphi 0, %s93
      %s97 = sphi 0, %s96
      %s113 = sphi 0, %s97
      %s117 = sphi 0, %s117
      %s119 = sphi 0, %s117
      %s120 = sphi 0, %s119
      %s134 = sphi 0, %s120
      %s142 = sphi 0, %s144
      %s145 = sphi 0, %s142
      %s146 = sphi 0, %s145
      %s162 = sphi 0, %s146
    $region4: #{tpu_custom_call.1} parent=1 // loop_header_branch
      %16 = sbr.rel (%p14) target = $region8
    $region5: #{tpu_custom_call.1} parent=1 // loop_body
      %s18 = ssub.s32 %s13, 1
      %s19 = ssub.s32 %s13, 2
      %s26 = sadd.s32 1, %s21
      %p27 = scmp.ge.s32.totalorder %s26, 1
      %s28 = scalar_select %p27, 0, %s26
      %s29 = sadd.s32 1, %s20
      %s30 = scalar_select %p27, %s29, %s20
      %p31 = scmp.ge.s32.totalorder %s30, 2
      %s32 = scalar_select %p31, 0, %s30
      %s33 = ssub.s32 %s20, %s32
      %s34 = ssub.s32 %s21, %s28
      %s35 = sor.u32 %s33, %s34
      %p36 = scmp.eq.s32.totalorder %s35, 0
      %s38 = sadd.s32 %s37, 1
      %s39 = scalar_select %p36, %s37, %s38
      %p42 = pneg %p36
      %p43 = scmp.eq.s32.totalorder %s13, 1
      %p44 = por %p42, %p43
      %p45 = scmp.ne.s32.totalorder %s37, %s40
      %p46 = scmp.eq.s32.totalorder %s13, 0
      %p47 = por %p45, %p46
      %p48 = scmp.ne.s32.totalorder %s37, %s40
      %p49 = scmp.eq.s32.totalorder %s18, 1
      %p50 = por %p48, %p49
      %p51 = scmp.ne.s32.totalorder %s40, %s41
      %p52 = scmp.eq.s32.totalorder %s18, 0
      %p53 = por %p51, %p52
      %p54 = scmp.ne.s32.totalorder %s40, %s41
      %p55 = scmp.eq.s32.totalorder %s19, 1
      %p56 = por %p54, %p55
      %p58 = scmp.ne.s32.totalorder %s41, %s57
      %p59 = scmp.eq.s32.totalorder %s19, 0
      %p60 = por %p58, %p59
      %s61 = ssub.s32 %s20, %s32
      %s62 = ssub.s32 %s21, %s28
      %s63 = sor.u32 %s61, %s62
      %p64 = scmp.eq.s32.totalorder %s63, 0
      %s66 = sadd.s32 %s65, 1
      %s67 = scalar_select %p64, %s65, %s66
      %p70 = pneg %p64
      %p71 = scmp.eq.s32.totalorder %s13, 1
      %p72 = por %p70, %p71
      %p73 = scmp.ne.s32.totalorder %s65, %s68
      %p74 = scmp.eq.s32.totalorder %s13, 0
      %p75 = por %p73, %p74
      %p76 = scmp.ne.s32.totalorder %s65, %s68
      %p77 = scmp.eq.s32.totalorder %s18, 1
      %p78 = por %p76, %p77
      %p79 = scmp.ne.s32.totalorder %s68, %s69
      %p80 = scmp.eq.s32.totalorder %s18, 0
      %p81 = por %p79, %p80
      %p82 = scmp.ne.s32.totalorder %s68, %s69
      %p83 = scmp.eq.s32.totalorder %s19, 1
      %p84 = por %p82, %p83
      %p86 = scmp.ne.s32.totalorder %s69, %s85
      %p87 = scmp.eq.s32.totalorder %s19, 0
      %p88 = por %p86, %p87
      %s89 = ssub.s32 %s20, %s32
      %s90 = ssub.s32 %s21, %s28
      %s91 = sor.u32 %s89, %s90
      %p92 = scmp.eq.s32.totalorder %s91, 0
      %s94 = sadd.s32 %s93, 1
      %s95 = scalar_select %p92, %s93, %s94
      %p98 = pneg %p92
      %p99 = scmp.eq.s32.totalorder %s13, 1
      %p100 = por %p98, %p99
      %p101 = scmp.ne.s32.totalorder %s93, %s96
      %p102 = scmp.eq.s32.totalorder %s13, 0
      %p103 = por %p101, %p102
      %p104 = scmp.ne.s32.totalorder %s93, %s96
      %p105 = scmp.eq.s32.totalorder %s18, 1
      %p106 = por %p104, %p105
      %p107 = scmp.ne.s32.totalorder %s96, %s97
      %p108 = scmp.eq.s32.totalorder %s18, 0
      %p109 = por %p107, %p108
      %p110 = scmp.ne.s32.totalorder %s96, %s97
      %p111 = scmp.eq.s32.totalorder %s19, 1
      %p112 = por %p110, %p111
      %p114 = scmp.ne.s32.totalorder %s97, %s113
      %p115 = scmp.eq.s32.totalorder %s19, 0
      %p116 = por %p114, %p115
      %s118 = sadd.s32 %s117, 1
      %p121 = scmp.eq.s32.totalorder %s13, 1
      %p122 = scmp.ne.s32.totalorder %s117, %s119
      %p123 = scmp.eq.s32.totalorder %s13, 0
      %p124 = por %p122, %p123
      %p125 = scmp.ne.s32.totalorder %s117, %s119
      %p126 = scmp.eq.s32.totalorder %s18, 1
      %p127 = por %p125, %p126
      %p128 = scmp.ne.s32.totalorder %s119, %s120
      %p129 = scmp.eq.s32.totalorder %s18, 0
      %p130 = por %p128, %p129
      %p131 = scmp.ne.s32.totalorder %s119, %s120
      %p132 = scmp.eq.s32.totalorder %s19, 1
      %p133 = por %p131, %p132
      %p135 = scmp.ne.s32.totalorder %s120, %s134
      %p136 = scmp.eq.s32.totalorder %s19, 0
      %p137 = por %p135, %p136
      %s138 = ssub.s32 %s20, %s32
      %s139 = ssub.s32 %s21, %s28
      %s140 = sor.u32 %s138, %s139
      %p141 = scmp.eq.s32.totalorder %s140, 0
      %s143 = sadd.s32 %s142, 1
      %s144 = scalar_select %p141, %s142, %s143
      %p147 = pneg %p141
      %p148 = scmp.eq.s32.totalorder %s13, 1
      %p149 = por %p147, %p148
      %p150 = scmp.ne.s32.totalorder %s142, %s145
      %p151 = scmp.eq.s32.totalorder %s13, 0
      %p152 = por %p150, %p151
      %p153 = scmp.ne.s32.totalorder %s142, %s145
      %p154 = scmp.eq.s32.totalorder %s18, 1
      %p155 = por %p153, %p154
      %p156 = scmp.ne.s32.totalorder %s145, %s146
      %p157 = scmp.eq.s32.totalorder %s18, 0
      %p158 = por %p156, %p157
      %p159 = scmp.ne.s32.totalorder %s145, %s146
      %p160 = scmp.eq.s32.totalorder %s19, 1
      %p161 = por %p159, %p160
      %p163 = scmp.ne.s32.totalorder %s146, %s162
      %p164 = scmp.eq.s32.totalorder %s19, 0
      %p165 = por %p163, %p164
      %p166 = scmp.le.s32.totalorder 1, %s13
      %p167 = scmp.lt.s32.totalorder %s13, 3
      %p168 = pnand %p166, %p167
      %p169 = pneg %p168
      // Predicated region
      $region9: #{tpu_custom_call.1} parent=5 // pred_check
        _
      $region10: #{tpu_custom_call.1} parent=5 // pred_check_branch
        %171 = sbr.rel (%p168) target = $region12
      $region11: #{tpu_custom_call.1} parent=5 // pred_region
        %s172 = ssub.s32 %s13, 1
        // Predicated region
        $region13: #{tpu_custom_call.1} parent=11 // pred_check
          %p173 = pneg %p130
        $region14: #{tpu_custom_call.1} parent=11 // pred_check_branch
          %175 = sbr.rel (%p173) target = $region16
        $region15: #{tpu_custom_call.1} parent=11 // pred_region
          _
        $region16: #{tpu_custom_call.1} parent=11 // pred_fallthru
          _
      $region12: #{tpu_custom_call.1} parent=5 // pred_fallthru
        _
      %p176 = scmp.lt.s32.totalorder %s13, 2
      // Predicated region
      $region17: #{tpu_custom_call.1} parent=5 // pred_check
        %p177 = pneg %p176
      $region18: #{tpu_custom_call.1} parent=5 // pred_check_branch
        %179 = sbr.rel (%p177) target = $region20
      $region19: #{tpu_custom_call.1} parent=5 // pred_region
        // Predicated region
        $region21: #{tpu_custom_call.1} parent=19 // pred_check
          %p180 = pneg %p47
        $region22: #{tpu_custom_call.1} parent=19 // pred_check_branch
          %182 = sbr.rel (%p180) target = $region24
        $region23: #{tpu_custom_call.1} parent=19 // pred_region
          %p183 = scmp.lt.s32.totalorder %s20, 1
          %s184 = scalar_select %p183, %s20, 1
          %p185 = scmp.lt.s32.totalorder %s21, 0
          %s186 = scalar_select %p185, %s21, 0
          %s187 = sadd.s32 %s186, %s184
          %s188 = smul.addr %s187, 8
          %s189 = scalar_lea.vmem %s0, %s188
        $region24: #{tpu_custom_call.1} parent=19 // pred_fallthru
          _
        // Predicated region
        $region25: #{tpu_custom_call.1} parent=19 // pred_check
          %p190 = pneg %p75
        $region26: #{tpu_custom_call.1} parent=19 // pred_check_branch
          %192 = sbr.rel (%p190) target = $region28
        $region27: #{tpu_custom_call.1} parent=19 // pred_region
          %p193 = scmp.lt.s32.totalorder %s20, 1
          %s194 = scalar_select %p193, %s20, 1
          %p195 = scmp.lt.s32.totalorder %s21, 0
          %s196 = scalar_select %p195, %s21, 0
          %s197 = sadd.s32 %s196, %s194
          %s198 = smul.addr %s197, 8
          %s199 = scalar_lea.vmem %s1, %s198
        $region28: #{tpu_custom_call.1} parent=19 // pred_fallthru
          _
        // Predicated region
        $region29: #{tpu_custom_call.1} parent=19 // pred_check
          %p200 = pneg %p103
        $region30: #{tpu_custom_call.1} parent=19 // pred_check_branch
          %202 = sbr.rel (%p200) target = $region32
        $region31: #{tpu_custom_call.1} parent=19 // pred_region
          %p203 = scmp.lt.s32.totalorder %s20, 1
          %s204 = scalar_select %p203, %s20, 1
          %p205 = scmp.lt.s32.totalorder %s21, 0
          %s206 = scalar_select %p205, %s21, 0
          %s207 = sadd.s32 %s206, %s204
          %s208 = scalar_lea.vmem %s2, %s207
        $region32: #{tpu_custom_call.1} parent=19 // pred_fallthru
          _
      $region20: #{tpu_custom_call.1} parent=5 // pred_fallthru
        _
      %p209 = scmp.le.s32.totalorder 1, %s13
      %p210 = scmp.lt.s32.totalorder %s13, 3
      %p211 = pnand %p209, %p210
      %p212 = pneg %p211
      // Predicated region
      $region33: #{tpu_custom_call.1} parent=5 // pred_check
        _
      $region34: #{tpu_custom_call.1} parent=5 // pred_check_branch
        %214 = sbr.rel (%p211) target = $region36
      $region35: #{tpu_custom_call.1} parent=5 // pred_region
        %s215 = ssub.s32 %s13, 1
        %p216 = scmp.lt.s32.totalorder %s22, 1
        %s217 = scalar_select %p216, %s22, 1
        %p218 = scmp.lt.s32.totalorder %s23, 0
        %s219 = scalar_select %p218, %s23, 0
        %s220 = sadd.s32 %s219, %s217
        %s221 = smul.addr %s220, 8
        %s222 = scalar_lea.vmem %s0, %s221
        %p223 = pneg %p53
        %p224 = pneg %p50
        %p225 = scmp.lt.s32.totalorder %s22, 1
        %s226 = scalar_select %p225, %s22, 1
        %p227 = scmp.lt.s32.totalorder %s23, 0
        %s228 = scalar_select %p227, %s23, 0
        %s229 = sadd.s32 %s228, %s226
        %s230 = smul.addr %s229, 8
        %s231 = scalar_lea.vmem %s1, %s230
        %p232 = pneg %p81
        %p233 = pneg %p78
        %p234 = scmp.lt.s32.totalorder %s22, 1
        %s235 = scalar_select %p234, %s22, 1
        %p236 = scmp.lt.s32.totalorder %s23, 0
        %s237 = scalar_select %p236, %s23, 0
        %s238 = sadd.s32 %s237, %s235
        %s239 = scalar_lea.vmem %s2, %s238
        %p240 = pneg %p109
        %p241 = pneg %p106
        %p242 = pneg %p130
        %p243 = pneg %p127
        %p244 = pneg %p158
        %p245 = pneg %p155
        %s246 = sand.u32 %s145, 1
        %s247 = scalar_lea.sflag [#allocation3], %s246
        %s248 = sand.u32 %s145, 1
        %s249 = scalar_lea.vmem [#allocation2], %s248
        %p250 = scmp.lt.s32.totalorder %s22, 1
        %s251 = scalar_select %p250, %s22, 1
        %p252 = scmp.lt.s32.totalorder %s23, 0
        %s253 = scalar_select %p252, %s23, 0
        %s254 = sadd.s32 %s253, %s251
        %s255 = smul.addr %s254, 8
        %s256 = scalar_lea.vmem %s0, %s255
        %p257 = scmp.lt.s32.totalorder %s22, 1
        %s258 = scalar_select %p257, %s22, 1
        %p259 = scmp.lt.s32.totalorder %s23, 0
        %s260 = scalar_select %p259, %s23, 0
        %s261 = sadd.s32 %s260, %s258
        %s262 = smul.addr %s261, 8
        %s263 = scalar_lea.vmem %s1, %s262
        %p264 = scmp.lt.s32.totalorder %s22, 1
        %s265 = scalar_select %p264, %s22, 1
        %p266 = scmp.lt.s32.totalorder %s23, 0
        %s267 = scalar_select %p266, %s23, 0
        %s268 = sadd.s32 %s267, %s265
        %s269 = scalar_lea.vmem %s2, %s268
        %v270 = vld [vmem:[%s256] sm:$0xff]
        %271 = vxpose.xlu0.b32.start [1/16] %v270, 128
        %272 = vxpose.xlu0.b32.cont [2/16] 0.0, 128
        %273 = vxpose.xlu0.b32.cont [3/16] 0.0, 128
        %274 = vxpose.xlu0.b32.cont [4/16] 0.0, 128
        %275 = vxpose.xlu0.b32.cont [5/16] 0.0, 128
        %276 = vxpose.xlu0.b32.cont [6/16] 0.0, 128
        %277 = vxpose.xlu0.b32.cont [7/16] 0.0, 128
        %278 = vxpose.xlu0.b32.cont [8/16] 0.0, 128
        %279 = vxpose.xlu0.b32.cont [9/16] 0.0, 128
        %280 = vxpose.xlu0.b32.cont [10/16] 0.0, 128
        %281 = vxpose.xlu0.b32.cont [11/16] 0.0, 128
        %282 = vxpose.xlu0.b32.cont [12/16] 0.0, 128
        %283 = vxpose.xlu0.b32.cont [13/16] 0.0, 128
        %284 = vxpose.xlu0.b32.cont [14/16] 0.0, 128
        %285 = vxpose.xlu0.b32.cont [15/16] 0.0, 128
        %286 = vxpose.xlu0.b32.end [16/16] 0.0, 128
        %v287 = vpop.trf.xlu0
        %v288 = vpop.trf.xlu0
        %v289 = vpop.trf.xlu0
        %v290 = vpop.trf.xlu0
        %v291 = vpop.trf.xlu0
        %v292 = vpop.trf.xlu0
        %v293 = vpop.trf.xlu0
        %v294 = vpop.trf.xlu0
        %v295 = vpop.trf.xlu0
        %v296 = vpop.trf.xlu0
        %v297 = vpop.trf.xlu0
        %v298 = vpop.trf.xlu0
        %v299 = vpop.trf.xlu0
        %v300 = vpop.trf.xlu0
        %v301 = vpop.trf.xlu0
        %v302 = vpop.trf.xlu0
        %v303 = vld [vmem:[%s263] sm:$0xff]
        %304 = vxpose.xlu0.b32.start [1/16] %v303, 128
        %305 = vxpose.xlu0.b32.cont [2/16] 0.0, 128
        %306 = vxpose.xlu0.b32.cont [3/16] 0.0, 128
        %307 = vxpose.xlu0.b32.cont [4/16] 0.0, 128
        %308 = vxpose.xlu0.b32.cont [5/16] 0.0, 128
        %309 = vxpose.xlu0.b32.cont [6/16] 0.0, 128
        %310 = vxpose.xlu0.b32.cont [7/16] 0.0, 128
        %311 = vxpose.xlu0.b32.cont [8/16] 0.0, 128
        %312 = vxpose.xlu0.b32.cont [9/16] 0.0, 128
        %313 = vxpose.xlu0.b32.cont [10/16] 0.0, 128
        %314 = vxpose.xlu0.b32.cont [11/16] 0.0, 128
        %315 = vxpose.xlu0.b32.cont [12/16] 0.0, 128
        %316 = vxpose.xlu0.b32.cont [13/16] 0.0, 128
        %317 = vxpose.xlu0.b32.cont [14/16] 0.0, 128
        %318 = vxpose.xlu0.b32.cont [15/16] 0.0, 128
        %319 = vxpose.xlu0.b32.end [16/16] 0.0, 128
        %v320 = vpop.trf.xlu0
        %v321 = vpop.trf.xlu0
        %v322 = vpop.trf.xlu0
        %v323 = vpop.trf.xlu0
        %v324 = vpop.trf.xlu0
        %v325 = vpop.trf.xlu0
        %v326 = vpop.trf.xlu0
        %v327 = vpop.trf.xlu0
        %v328 = vpop.trf.xlu0
        %v329 = vpop.trf.xlu0
        %v330 = vpop.trf.xlu0
        %v331 = vpop.trf.xlu0
        %v332 = vpop.trf.xlu0
        %v333 = vpop.trf.xlu0
        %v334 = vpop.trf.xlu0
        %v335 = vpop.trf.xlu0
        %v336 = vld [vmem:[%s3] sm:$0xff]
        %v337 = vld [vmem:[%s3 + $0x8] sm:$0xff]
        %v338 = vld [vmem:[%s3 + $0x10] sm:$0xff]
        %v339 = vld [vmem:[%s3 + $0x18] sm:$0xff]
        %341 = vset.pattern.permute.xlu0 0
        %342 = vperm.xlu0 %341, %v336
        %v343 = vpop.permute.xlu0 %342
        %346 = vset.pattern.permute.xlu0 0
        %347 = vperm.xlu0 %346, %v337
        %v348 = vpop.permute.xlu0 %347
        %351 = vset.pattern.permute.xlu0 0
        %352 = vperm.xlu0 %351, %v338
        %v353 = vpop.permute.xlu0 %352
        %356 = vset.pattern.permute.xlu0 0
        %357 = vperm.xlu0 %356, %v339
        %v358 = vpop.permute.xlu0 %357
        %v360 = vmul.f32 %v287, %v343
        %v361 = vmul.f32 %v288, %v348
        %v362 = vmul.f32 %v289, %v353
        %v363 = vmul.f32 %v290, %v358
        %364 = vset.pattern.permute.xlu0 1
        %365 = vperm.xlu0 %364, %v336
        %v366 = vpop.permute.xlu0 %365
        %368 = vset.pattern.permute.xlu0 1
        %369 = vperm.xlu0 %368, %v337
        %v370 = vpop.permute.xlu0 %369
        %372 = vset.pattern.permute.xlu0 1
        %373 = vperm.xlu0 %372, %v338
        %v374 = vpop.permute.xlu0 %373
        %376 = vset.pattern.permute.xlu0 1
        %377 = vperm.xlu0 %376, %v339
        %v378 = vpop.permute.xlu0 %377
        %v380 = vmul.f32 %v320, %v366
        %v381 = vmul.f32 %v321, %v370
        %v382 = vmul.f32 %v322, %v374
        %v383 = vmul.f32 %v323, %v378
        %v384 = vadd.f32 %v360, %v380
        %v385 = vadd.f32 %v361, %v381
        %v386 = vadd.f32 %v362, %v382
        %v387 = vadd.f32 %v363, %v383
        %v388 = vmul.f32 %v287, %v320
        %v389 = vmul.f32 %v288, %v321
        %v390 = vmul.f32 %v289, %v322
        %v391 = vmul.f32 %v290, %v323
        %392 = vset.pattern.permute.xlu0 2
        %393 = vperm.xlu0 %392, %v336
        %v394 = vpop.permute.xlu0 %393
        %396 = vset.pattern.permute.xlu0 2
        %397 = vperm.xlu0 %396, %v337
        %v398 = vpop.permute.xlu0 %397
        %400 = vset.pattern.permute.xlu0 2
        %401 = vperm.xlu0 %400, %v338
        %v402 = vpop.permute.xlu0 %401
        %404 = vset.pattern.permute.xlu0 2
        %405 = vperm.xlu0 %404, %v339
        %v406 = vpop.permute.xlu0 %405
        %v408 = vmul.f32 %v388, %v394
        %v409 = vmul.f32 %v389, %v398
        %v410 = vmul.f32 %v390, %v402
        %v411 = vmul.f32 %v391, %v406
        %v412 = vadd.f32 %v384, %v408
        %v413 = vadd.f32 %v385, %v409
        %v414 = vadd.f32 %v386, %v410
        %v415 = vadd.f32 %v387, %v411
        %vm416 = vcmask 64512
        %v417 = vsel %vm416, %v412, 0.0
        %v418 = vsel %vm416, %v413, 0.0
        %v419 = vadd.f32 %v417, %v418
        %v420 = vsel %vm416, %v414, 0.0
        %v421 = vadd.f32 %v419, %v420
        %v422 = vsel %vm416, %v415, 0.0
        %v423 = vadd.f32 %v421, %v422
        %v424 = vrot.slane %v423, 4
        %v425 = vadd.f32 %v423, %v424
        %v426 = vrot.slane %v425, 2
        %v427 = vadd.f32 %v425, %v426
        %v428 = vrot.slane %v427, 1
        %v429 = vadd.f32 %v427, %v428
        %v430 = vld [vmem:[%s269] sm:$0x1]
        %v431 = vadd.f32 %v429, %v430
        %vm432 = vcmask 57344
        %433 = vst.msk [vmem:[%s249] sm:$0x1] %vm432, %v431
        %s434 = sand.u32 %s145, 1
        %s435 = scalar_lea.sflag [#allocation3], %s434
        %s436 = sand.u32 %s145, 1
        %s437 = scalar_lea.vmem [#allocation2], %s436
        // Predicated region
        $region37: #{tpu_custom_call.1} parent=35 // pred_check
          %p438 = pneg %p155
        $region38: #{tpu_custom_call.1} parent=35 // pred_check_branch
          %440 = sbr.rel (%p438) target = $region40
        $region39: #{tpu_custom_call.1} parent=35 // pred_region
          %s442 = ssub.s32 16, 16
          %443 = vsyncadd %s435, %s442
          %s444 = sadd.s32 %s23, %s22
          %s445 = smul.addr %s444, 16
          %s446 = scalar_lea.hbm %s4, %s445
          %s448 = sshll.u32 %s437, 4
          %s449 = int_to_ptr.vmem [resolvable:$true] %s448
          %451 = dma.vmem_to_hbm [thread:$0]  %s449, 16, %s446, %s435
        $region40: #{tpu_custom_call.1} parent=35 // pred_fallthru
          _
      $region36: #{tpu_custom_call.1} parent=5 // pred_fallthru
        _
      %p452 = scmp.le.s32.totalorder 2, %s13
      // Predicated region
      $region41: #{tpu_custom_call.1} parent=5 // pred_check
        %p453 = pneg %p452
      $region42: #{tpu_custom_call.1} parent=5 // pred_check_branch
        %455 = sbr.rel (%p453) target = $region44
      $region43: #{tpu_custom_call.1} parent=5 // pred_region
        %s456 = ssub.s32 %s13, 2
        // Predicated region
        $region45: #{tpu_custom_call.1} parent=43 // pred_check
          %p457 = pneg %p161
        $region46: #{tpu_custom_call.1} parent=43 // pred_check_branch
          %459 = sbr.rel (%p457) target = $region48
        $region47: #{tpu_custom_call.1} parent=43 // pred_region
          %s460 = sand.u32 %s146, 1
          %s461 = scalar_lea.sflag [#allocation3], %s460
          %s462 = sand.u32 %s146, 1
          %s463 = scalar_lea.vmem [#allocation2], %s462
          %464 = dma.done %s461, 16
        $region48: #{tpu_custom_call.1} parent=43 // pred_fallthru
          _
      $region44: #{tpu_custom_call.1} parent=5 // pred_fallthru
        _
    $region6: #{tpu_custom_call.1} parent=1 // loop_footer
      %s17 = sadd.s32 1, %s13
    $region7: #{tpu_custom_call.1} parent=1 // loop_footer_branch
      %12 = sbr.rel target = $region3
    $region8: #{tpu_custom_call.1} parent=1 // loop_exit
      _
    %465 = vsyncpa [#allocation3], 1
    %s466 = scalar_lea.sflag [#allocation3], 1
    %467 = vsyncpa %s466, 1

</llo_original>
